<compile_context>
chip_gen: v6e
topology: v6e:2x2x1
jax: 0.10.0
libtpu: 0.0.40
codegen_flags: <defaults>
</compile_context>

<pallas_src>
import math

import jax
import jax.numpy as jnp
from jax.experimental import pallas as pl
from jax.experimental.pallas import tpu as pltpu

# ----------------------------------------------------------------------------
# Model hyper-parameters (small, consistent with hidden_size = input_size + 10)
# ----------------------------------------------------------------------------
INPUT_SIZE = 22
HIDDEN_SIZE = INPUT_SIZE + 10          # 32
OUTPUT_SIZE = 10
BATCH = 16


# ----------------------------------------------------------------------------
# Pallas kernel: the whole (folded) forward pass as one MXU matmul + bias add.
# All operands are whole-array VMEM refs in their natural shapes.
# ----------------------------------------------------------------------------
def fused_affine_kernel(x_ref, w_ref, b_ref, o_ref):
    o_ref[...] = (
        jnp.dot(x_ref[...], w_ref[...], preferred_element_type=jnp.float32)
        + b_ref[...]
    ).astype(o_ref.dtype)


# ----------------------------------------------------------------------------
# One-time parameter preprocessing: fold fc1/fc2 into a single affine map.
# Mathematically exact since the module has no nonlinearity between layers
# (accumulation order differs from the two-layer reference at f32 rounding).
# ----------------------------------------------------------------------------
def fold_params(params):
    w1t, b1, w2t, b2 = params                     # (in,h), (1,h), (h,out), (1,out)
    w_eff = w1t @ w2t                             # (in, out)
    b_eff = b1 @ w2t + b2                         # (1, out)
    return w_eff, b_eff


# ----------------------------------------------------------------------------
# Wrapper: gridless pallas_call, whole arrays resident in VMEM, no wrapper-side
# pad/slice dispatches.
# ----------------------------------------------------------------------------
def nn_2layers_forward(x, folded_params):
    """x: (B, INPUT_SIZE) float32.  Returns (B, OUTPUT_SIZE) float32."""
    w_eff, b_eff = folded_params
    B = x.shape[0]

    def vmem():
        return pl.BlockSpec(memory_space=pltpu.MemorySpace.VMEM)

    flops = 2 * B * INPUT_SIZE * OUTPUT_SIZE + B * OUTPUT_SIZE
    bytes_accessed = 4 * (x.size + w_eff.size + b_eff.size + B * OUTPUT_SIZE)

    return pl.pallas_call(
        fused_affine_kernel,
        out_shape=jax.ShapeDtypeStruct((B, OUTPUT_SIZE), jnp.float32),
        in_specs=[vmem(), vmem(), vmem()],
        out_specs=vmem(),
        cost_estimate=pl.CostEstimate(
            flops=flops, transcendentals=0, bytes_accessed=bytes_accessed),
    )(x, w_eff, b_eff)


# ----------------------------------------------------------------------------
# Deterministic parameter init, mirroring the PyTorch module:
#   - weights: init.xavier_uniform_ -> U(-a, a), a = sqrt(6/(fan_in+fan_out))
#   - biases : nn.Linear default    -> U(-1/sqrt(fan_in), 1/sqrt(fan_in))
# Weights are built directly in (in, out) layout (transposed vs. PyTorch's
# (out, in)); the xavier distribution is symmetric so this is equivalent.
# ----------------------------------------------------------------------------
def init_params(key):
    k1, k2, k3, k4 = jax.random.split(key, 4)

    def xavier_t(k, fan_in, fan_out):
        bound = math.sqrt(6.0 / (fan_in + fan_out))
        return jax.random.uniform(k, (fan_in, fan_out), jnp.float32, -bound, bound)

    def linear_bias(k, fan_in, n):
        bound = 1.0 / math.sqrt(fan_in)
        return jax.random.uniform(k, (1, n), jnp.float32, -bound, bound)

    w1t = xavier_t(k1, INPUT_SIZE, HIDDEN_SIZE)       # fc1 weight^T (in, hidden)
    b1 = linear_bias(k2, INPUT_SIZE, HIDDEN_SIZE)     # fc1 bias     (1, hidden)
    w2t = xavier_t(k3, HIDDEN_SIZE, OUTPUT_SIZE)      # fc2 weight^T (hidden, out)
    b2 = linear_bias(k4, HIDDEN_SIZE, OUTPUT_SIZE)    # fc2 bias     (1, out)
    return w1t, b1, w2t, b2


def reference_forward(x, params):
    """Pure-JAX reference: the unfused two-layer forward of the module."""
    w1t, b1, w2t, b2 = params
    h = x @ w1t + b1
    return h @ w2t + b2


if __name__ == "__main__":
    key = jax.random.PRNGKey(0)
    kx, kp = jax.random.split(key)

    x = jax.random.normal(kx, (BATCH, INPUT_SIZE), jnp.float32)
    params = init_params(kp)

    # One-time fold (parameter preprocessing, outside the hot path).
    folded = jax.block_until_ready(fold_params(params))

    out = nn_2layers_forward(x, folded)
    out = jax.block_until_ready(out)

    ref = reference_forward(x, params)
    assert out.shape == (BATCH, OUTPUT_SIZE)
    assert jnp.allclose(out, ref, rtol=1e-4, atol=1e-4), "mismatch vs reference"

    print("KERNEL_OK")
</pallas_src>

<mosaic_0001>
module attributes {stable_mosaic.version = 11 : i64} {
  func.func @fused_affine_kernel(%arg0: memref<16x22xf32, #tpu.memory_space<vmem>>, %arg1: memref<22x10xf32, #tpu.memory_space<vmem>>, %arg2: memref<1x10xf32, #tpu.memory_space<vmem>>, %arg3: memref<16x10xf32, #tpu.memory_space<vmem>>) attributes {dimension_semantics = [], scalar_prefetch = 0 : i64, scratch_operands = 0 : i64, tpu.core_type = #tpu.core_type<tc>} {
    %c0 = arith.constant 0 : index
    %c0_0 = arith.constant 0 : index
    %0 = vector.load %arg0[%c0, %c0_0] : memref<16x22xf32, #tpu.memory_space<vmem>>, vector<16x22xf32>
    %c0_1 = arith.constant 0 : index
    %c0_2 = arith.constant 0 : index
    %1 = vector.load %arg1[%c0_1, %c0_2] : memref<22x10xf32, #tpu.memory_space<vmem>>, vector<22x10xf32>
    %cst = arith.constant dense<0.000000e+00> : vector<16x10xf32>
    %2 = tpu.matmul %0, %1, %cst {dimension_numbers = #tpu.dot_dimension_numbers<[1], [0], [0], [1], [0, 0, 1, 1], [], []>} : vector<16x22xf32>, vector<22x10xf32>, vector<16x10xf32> -> vector<16x10xf32>
    %c0_3 = arith.constant 0 : index
    %c0_4 = arith.constant 0 : index
    %3 = vector.load %arg2[%c0_3, %c0_4] : memref<1x10xf32, #tpu.memory_space<vmem>>, vector<1x10xf32>
    %4 = vector.broadcast %3 : vector<1x10xf32> to vector<16x10xf32>
    %5 = arith.addf %2, %4 : vector<16x10xf32>
    %c0_5 = arith.constant 0 : index
    %c0_6 = arith.constant 0 : index
    %6 = vector.load %arg3[%c0_5, %c0_6] : memref<16x10xf32, #tpu.memory_space<vmem>>, vector<16x10xf32>
    tpu.vector_store %arg3[%c0_5, %c0_6], %5 {strides = array<i32>} : memref<16x10xf32, #tpu.memory_space<vmem>>, vector<16x10xf32>,
    return
  }
}

</mosaic_0001>

<llo_original>
// kernel: tpu_custom_call.1
$region0: #{tpu_custom_call.1}
  #allocation0 [shape = 'u32[]', space=smem, size = 0x4, offset = 0x4, fixed_abs, tag = 'smem constant byte address 0x4 - core index']
  #allocation1 [shape = 'u32[144,128]{1,0:T(1,128)}', space=vmem, size = 0x12000, scoped, tag = 'internal scratch']
  %s0 = inlined_call_operand.vmem [shape: f32[16,22], index: 0, kind: input, shape index: {}]
  %s1 = inlined_call_operand.vmem [shape: f32[22,10], index: 1, kind: input, shape index: {}]
  %s2 = inlined_call_operand.vmem [shape: f32[1,10], index: 2, kind: input, shape index: {}]
  %s3 = inlined_call_operand.hbm [shape: f32[16,10], index: 3, kind: output, shape index: {}]
  %s4 = sld [smem:[#allocation0]]
  $region22: #{tpu_custom_call.1} parent=0
    _
  %s6 = ssub.s32 1, %s4
  %s7 = scalar_select 0, %s6, %s4
  $region1: #{tpu_custom_call.1} parent=0
    #allocation2 [shape = 'u8[8192]{0}', space=vmem, size = 0x2000, scoped, tag = 'output window, operand 0, single buffered']
    #allocation3 [shape = 's32[1]{0}', space=sflag, size = 0x4, scoped, tag = 'scoped memory for tpu_custom_call.1']
    %8 = vsyncpa [#allocation3], 0
    // Predicated region
    $region2: #{tpu_custom_call.1} parent=1 // pred_check
      _
    $region3: #{tpu_custom_call.1} parent=1 // pred_check_branch
      %10 = sbr.rel (0) target = $region5
    $region4: #{tpu_custom_call.1} parent=1 // pred_region
      _
    $region5: #{tpu_custom_call.1} parent=1 // pred_fallthru
      _
    // Predicated region
    $region6: #{tpu_custom_call.1} parent=1 // pred_check
      _
    $region7: #{tpu_custom_call.1} parent=1 // pred_check_branch
      %12 = sbr.rel (0) target = $region9
    $region8: #{tpu_custom_call.1} parent=1 // pred_region
      _
    $region9: #{tpu_custom_call.1} parent=1 // pred_fallthru
      _
    // Predicated region
    $region10: #{tpu_custom_call.1} parent=1 // pred_check
      _
    $region11: #{tpu_custom_call.1} parent=1 // pred_check_branch
      %14 = sbr.rel (0) target = $region13
    $region12: #{tpu_custom_call.1} parent=1 // pred_region
      _
    $region13: #{tpu_custom_call.1} parent=1 // pred_fallthru
      _
    %v15 = vld [vmem:[%s0] sm:$0xff]
    %v16 = vld [vmem:[%s0 + $0x8] sm:$0xff]
    %v17 = vld [vmem:[%s1] sm:$0xff]
    %v18 = vld [vmem:[%s1 + $0x8] sm:$0xff]
    %v19 = vld [vmem:[%s1 + $0x10] sm:$0x3f]
    %v20 = vld [vmem:[%s2] sm:$0x1]
    %v22 = vlaneseq
    %v23 = vshrl.u32 %v22, 7
    %v24 = vsub.s32 0, %v23
    %v25 = vrot.slane %v20, %v24
    %vm27 = vcmask 179200
    %v29 = vsel %vm27, %v15, 0
    %v32 = vsel %vm27, %v16, 0
    %vm34 = vcmask 1045504
    %v36 = vsel %vm34, %v19, 0
    %38 = vmatprep.subr.mxu0 0.0
    %39 = vmatpush1.msra.mxu0 0.0
    %40 = vmatprep.subr.mxu0 0.0
    %41 = vmatpush1.msra.mxu0 0.0
    %42 = vmatprep.subr.mxu0 0.0
    %43 = vmatpush1.msra.mxu0 0.0
    %44 = vmatprep.subr.mxu0 0.0
    %45 = vmatpush1.msra.mxu0 0.0
    %46 = vmatprep.subr.mxu0 0.0
    %47 = vmatpush1.msra.mxu0 0.0
    %48 = vmatprep.subr.mxu0 0.0
    %49 = vmatpush1.msra.mxu0 0.0
    %50 = vmatprep.subr.mxu0 0.0
    %51 = vmatpush1.msra.mxu0 0.0
    %52 = vmatprep.subr.mxu0 0.0
    %53 = vmatpush1.msra.mxu0 0.0
    %54 = vmatprep.subr.mxu0 0.0
    %55 = vmatpush1.msra.mxu0 0.0
    %56 = vmatprep.subr.mxu0 0.0
    %57 = vmatpush1.msra.mxu0 0.0
    %58 = vmatprep.subr.mxu0 0.0
    %59 = vmatpush1.msra.mxu0 0.0
    %60 = vmatprep.subr.mxu0 0.0
    %61 = vmatpush1.msra.mxu0 0.0
    %62 = vmatprep.subr.mxu0 0.0
    %63 = vmatpush1.msra.mxu0 0.0
    %64 = vmatprep.subr.mxu0 0.0
    %65 = vmatpush1.msra.mxu0 %v36
    %66 = vmatprep.subr.mxu0 0.0
    %67 = vmatpush1.msra.mxu0 %v18
    %68 = vmatprep.subr.mxu0 0.0
    %69 = vmatpush1.msra.mxu0 %v17
    %70 = vmatprep.subr.mxu0 0.0
    %71 = vmatpush2.msra.mxu0 0.0
    %72 = vmatprep.subr.mxu0 0.0
    %73 = vmatpush2.msra.mxu0 0.0
    %74 = vmatprep.subr.mxu0 0.0
    %75 = vmatpush2.msra.mxu0 0.0
    %76 = vmatprep.subr.mxu0 0.0
    %77 = vmatpush2.msra.mxu0 0.0
    %78 = vmatprep.subr.mxu0 0.0
    %79 = vmatpush2.msra.mxu0 0.0
    %80 = vmatprep.subr.mxu0 0.0
    %81 = vmatpush2.msra.mxu0 0.0
    %82 = vmatprep.subr.mxu0 0.0
    %83 = vmatpush2.msra.mxu0 0.0
    %84 = vmatprep.subr.mxu0 0.0
    %85 = vmatpush2.msra.mxu0 0.0
    %86 = vmatprep.subr.mxu0 0.0
    %87 = vmatpush2.msra.mxu0 0.0
    %88 = vmatprep.subr.mxu0 0.0
    %89 = vmatpush2.msra.mxu0 0.0
    %90 = vmatprep.subr.mxu0 0.0
    %91 = vmatpush2.msra.mxu0 0.0
    %92 = vmatprep.subr.mxu0 0.0
    %93 = vmatpush2.msra.mxu0 0.0
    %94 = vmatprep.subr.mxu0 0.0
    %95 = vmatpush2.msra.mxu0 0.0
    %96 = vmatprep.subr.mxu0 0.0
    %97 = vmatpush2.msra.mxu0 0.0
    %98 = vmatprep.subr.mxu0 0.0
    %99 = vmatpush2.msra.mxu0 0.0
    %100 = vmatprep.subr.mxu0 0.0
    %101 = vmatpush2.msra.mxu0 0.0
    %102 = vmatprep.mubr.f32.mxu0 0.0
    %103 = vmatmul.mubr.f32.gmra.mxu0 %v29
    %v104 = vpop.f32.mrf.mxu0
    %v105 = vadd.f32 %v25, %v104
    %v106 = vpop.f32.mrf.mxu0
    %107 = vmatprep.mubr.f32.mxu0 0.0
    %108 = vmatmul.mubr.f32.gmra.mxu0 %v32
    %v109 = vpop.f32.mrf.mxu0
    %v110 = vadd.f32 %v25, %v109
    %v111 = vpop.f32.mrf.mxu0
    %112 = vdwg.mxu0
    %vm113 = vcmask 80896
    %114 = vst.msk [vmem:[#allocation2] sm:$0xff] %vm113, %v105
    %115 = vst.msk [vmem:[#allocation2 + $0x8] sm:$0xff] %vm113, %v110
    // Predicated region
    $region14: #{tpu_custom_call.1} parent=1 // pred_check
      _
    $region15: #{tpu_custom_call.1} parent=1 // pred_check_branch
      %117 = sbr.rel (0) target = $region17
    $region16: #{tpu_custom_call.1} parent=1 // pred_region
      %s119 = ssub.s32 256, 256
      %120 = vsyncadd [#allocation3], %s119
      %s121 = sshll.u32 [#allocation2], 4
      %s122 = int_to_ptr.vmem [resolvable:$true] %s121
      %127 = dma.vmem_to_hbm [thread:$0]  %s122, 256, %s3, [#allocation3], 128, 128, 8
    $region17: #{tpu_custom_call.1} parent=1 // pred_fallthru
      _
    // Predicated region
    $region18: #{tpu_custom_call.1} parent=1 // pred_check
      _
    $region19: #{tpu_custom_call.1} parent=1 // pred_check_branch
      %129 = sbr.rel (0) target = $region21
    $region20: #{tpu_custom_call.1} parent=1 // pred_region
      %130 = dma.done [#allocation3], 256
    $region21: #{tpu_custom_call.1} parent=1 // pred_fallthru
      _
    %131 = vsyncpa [#allocation3], 1

</llo_original>
